<compile_context>
chip_gen: v7x
topology: tpu7x:2x2x1
jax: 0.10.0
libtpu: 0.0.40
codegen_flags: <defaults>
</compile_context>

<pallas_src>
import jax
import jax.numpy as jnp
from jax.experimental import pallas as pl
from jax.experimental.pallas import tpu as pltpu


def ssconv_matmul_kernel(w_ref, b_ref, p_ref, o_ref):
    """One batch element: 3x3 conv as a single im2col matmul on the MXU.

    w_ref : (Cout, 9*Cin)    bf16  transposed, flattened conv weight
    b_ref : (Cout, 1)        f32   bias (broadcast along the lane dim)
    p_ref : (1, 9*Cin, H*W)  bf16  transposed im2col patches, one batch elem
    o_ref : (1, Cout, H*W)   f32   NCHW-flat conv output (lane dim = H*W)
    """
    acc = jnp.dot(w_ref[...], p_ref[0], preferred_element_type=jnp.float32)
    acc = acc + b_ref[...]                      # (Cout, H*W) + (Cout, 1)
    o_ref[0] = acc.astype(o_ref.dtype)


def ssconv_forward(x_nchw, weight, bias, up):
    """SSconv forward.

    x_nchw : (B, C, H, W)  float32
    weight : (3, 3, C, C*up*up)  (HWIO)
    bias   : (C*up*up,)
    returns: (B, C, H*up, W*up)  NCHW, matching the PyTorch module.
    """
    B, C, H, W = x_nchw.shape
    Cout = weight.shape[-1]
    assert Cout == C * up * up
    K9 = 9 * C
    HW = H * W

    # ---- im2col in the wrapper (review #1/#6): transposed patch matrix
    # (B, 9*Cin, H*W).  Lane dim is H*W (dense); K ordering is (dy, dx, cin),
    # matching the flattened weight below.  Works natively in NCHW.
    x_pad = jnp.pad(x_nchw, ((0, 0), (0, 0), (1, 1), (1, 1)))
    taps = [x_pad[:, :, dy:dy + H, dx:dx + W]
            for dy in range(3) for dx in range(3)]           # 9 x (B, C, H, W)
    patches = jnp.concatenate(taps, axis=1)                  # (B, 9*C, H, W)
    patches = patches.reshape(B, K9, HW).astype(jnp.bfloat16)

    # (3,3,Cin,Cout) -> (9*Cin, Cout) -> (Cout, 9*Cin), cast bf16 (review #4).
    w_t = jnp.transpose(weight.reshape(K9, Cout)).astype(jnp.bfloat16)
    bias2d = bias.reshape(Cout, 1).astype(jnp.float32)

    conv_flat = pl.pallas_call(
        ssconv_matmul_kernel,
        out_shape=jax.ShapeDtypeStruct((B, Cout, HW), x_nchw.dtype),
        grid=(B,),
        in_specs=[
            pl.BlockSpec((Cout, K9), lambda b: (0, 0)),      # constant weight
            pl.BlockSpec((Cout, 1), lambda b: (0, 0)),       # constant bias
            pl.BlockSpec((1, K9, HW), lambda b: (b, 0, 0)),  # per-batch patches
        ],
        out_specs=pl.BlockSpec((1, Cout, HW), lambda b: (b, 0, 0)),
        compiler_params=pltpu.CompilerParams(
            dimension_semantics=("parallel",)),              # 2-wide for v7x
    )(w_t, bias2d, patches)

    # ---- pixel-shuffle mapping (identical to the PyTorch module), pure layout.
    # conv_flat is already NCHW-flat: (B, Cout, H*W) == (B, Cout, H, W).
    C1 = Cout // (up * up)
    y = conv_flat.reshape(B, C1, up, up, H, W)
    y = jnp.transpose(y, (0, 1, 4, 2, 5, 3))                 # (B,C1,H,r,W,s)
    return y.reshape(B, C1, H * up, W * up)


def _reference(x_nchw, weight, bias, up):
    # Pure-JAX f32 reference (lax conv + pixel shuffle) for correctness check.
    out = jax.lax.conv_general_dilated(
        x_nchw, weight, window_strides=(1, 1), padding="SAME",
        dimension_numbers=("NCHW", "HWIO", "NCHW"))
    out = out + bias[None, :, None, None]
    B, Cout, H, W = out.shape
    C1 = Cout // (up * up)
    out = out.reshape(B, C1, up, up, H, W)
    out = jnp.transpose(out, (0, 1, 4, 2, 5, 3))
    return out.reshape(B, C1, H * up, W * up)


if __name__ == "__main__":
    B, C, H, W = 2, 4, 16, 16
    up = 2
    Cout = C * up * up

    key = jax.random.PRNGKey(0)
    kx, kw, kb = jax.random.split(key, 3)
    x = jax.random.normal(kx, (B, C, H, W), dtype=jnp.float32)
    # Deterministic synthetic parameters (Conv2d: in=C, out=C*up*up, k=3, bias).
    weight = jax.random.normal(kw, (3, 3, C, Cout), dtype=jnp.float32) * 0.1
    bias = jax.random.normal(kb, (Cout,), dtype=jnp.float32) * 0.1

    out = jax.block_until_ready(ssconv_forward(x, weight, bias, up))
    ref = jax.block_until_ready(_reference(x, weight, bias, up))

    assert out.shape == (B, C, H * up, W * up), out.shape
    # bf16 matmul operands (f32 accumulation) -> tolerance loosened vs the
    # pure-f32 reference, per the review's correctness note.
    assert jnp.allclose(out, ref, atol=3e-2, rtol=3e-2), "mismatch vs reference"

    print("KERNEL_OK")
</pallas_src>

<mosaic_0001>
module attributes {stable_mosaic.version = 11 : i64} {
  func.func @ssconv_matmul_kernel(%arg0: i32, %arg1: memref<16x36xbf16, #tpu.memory_space<vmem>>, %arg2: memref<16x1xf32, #tpu.memory_space<vmem>>, %arg3: memref<1x36x256xbf16, #tpu.memory_space<vmem>>, %arg4: memref<1x16x256xf32, #tpu.memory_space<vmem>>) attributes {dimension_semantics = [#tpu.dimension_semantics<parallel>], iteration_bounds = array<i64: 2>, scalar_prefetch = 0 : i64, scratch_operands = 0 : i64, tpu.core_type = #tpu.core_type<tc>, window_params = [{pipeline_mode = #tpu.pipeline_mode<synchronous>, transform_indices = @transform_0, window_bounds = array<i64: 16, 36>}, {pipeline_mode = #tpu.pipeline_mode<synchronous>, transform_indices = @transform_1, window_bounds = array<i64: 16, 1>}, {transform_indices = @transform_2, window_bounds = array<i64: 1, 36, 256>}, {transform_indices = @transform_3, window_bounds = array<i64: 1, 16, 256>}]} {
    %c0 = arith.constant 0 : index
    %c0_0 = arith.constant 0 : index
    %0 = vector.load %arg1[%c0, %c0_0] : memref<16x36xbf16, #tpu.memory_space<vmem>>, vector<16x36xbf16>
    %c0_1 = arith.constant 0 : index
    %c0_2 = arith.constant 0 : index
    %c0_3 = arith.constant 0 : index
    %1 = vector.load %arg3[%c0_1, %c0_2, %c0_3] : memref<1x36x256xbf16, #tpu.memory_space<vmem>>, vector<1x36x256xbf16>
    %2 = vector.shape_cast %1 : vector<1x36x256xbf16> to vector<36x256xbf16>
    %cst = arith.constant dense<0.000000e+00> : vector<16x256xf32>
    %3 = tpu.matmul %0, %2, %cst {dimension_numbers = #tpu.dot_dimension_numbers<[1], [0], [0], [1], [0, 0, 1, 1], [], []>} : vector<16x36xbf16>, vector<36x256xbf16>, vector<16x256xf32> -> vector<16x256xf32>
    %c0_4 = arith.constant 0 : index
    %c0_5 = arith.constant 0 : index
    %4 = vector.load %arg2[%c0_4, %c0_5] : memref<16x1xf32, #tpu.memory_space<vmem>>, vector<16x1xf32>
    %5 = vector.broadcast %4 : vector<16x1xf32> to vector<16x256xf32>
    %6 = arith.addf %3, %5 : vector<16x256xf32>
    %c0_6 = arith.constant 0 : index
    %c0_7 = arith.constant 0 : index
    %c0_8 = arith.constant 0 : index
    %7 = vector.load %arg4[%c0_6, %c0_7, %c0_8] : memref<1x16x256xf32, #tpu.memory_space<vmem>>, vector<1x16x256xf32>
    %8 = vector.shape_cast %7 : vector<1x16x256xf32> to vector<16x256xf32>
    %9 = vector.shape_cast %6 : vector<16x256xf32> to vector<1x16x256xf32>
    tpu.vector_store %arg4[%c0_6, %c0_7, %c0_8], %9 {strides = array<i32>} : memref<1x16x256xf32, #tpu.memory_space<vmem>>, vector<1x16x256xf32>,
    return
  }
  func.func @transform_0(%arg0: i32) -> (i32, i32) {
    %c0_i32 = arith.constant 0 : i32
    %c0_i32_0 = arith.constant 0 : i32
    %c0_i32_1 = arith.constant 0 : i32
    return %c0_i32, %c0_i32_0 : i32, i32
  }
  func.func @transform_1(%arg0: i32) -> (i32, i32) {
    %c0_i32 = arith.constant 0 : i32
    %c0_i32_0 = arith.constant 0 : i32
    %c0_i32_1 = arith.constant 0 : i32
    return %c0_i32, %c0_i32_0 : i32, i32
  }
  func.func @transform_2(%arg0: i32) -> (i32, i32, i32) {
    %c0_i32 = arith.constant 0 : i32
    %c0_i32_0 = arith.constant 0 : i32
    %c0_i32_1 = arith.constant 0 : i32
    return %arg0, %c0_i32, %c0_i32_0 : i32, i32, i32
  }
  func.func @transform_3(%arg0: i32) -> (i32, i32, i32) {
    %c0_i32 = arith.constant 0 : i32
    %c0_i32_0 = arith.constant 0 : i32
    %c0_i32_1 = arith.constant 0 : i32
    return %arg0, %c0_i32, %c0_i32_0 : i32, i32, i32
  }
}

</mosaic_0001>

<llo_original>
// kernel: tpu_custom_call.1
$region0: #{tpu_custom_call.1}
  #allocation0 [shape = 'u32[]', space=smem, size = 0x4, offset = 0x4, fixed_abs, tag = 'smem constant byte address 0x4 - core index']
  #allocation1 [shape = 'u32[144,128]{1,0:T(1,128)}', space=vmem, size = 0x12000, scoped, tag = 'internal scratch']
  %s0 = inlined_call_operand.vmem [shape: bf16[16,36], index: 0, kind: input, shape index: {}]
  %s1 = inlined_call_operand.vmem [shape: f32[16,1], index: 1, kind: input, shape index: {}]
  %s2 = inlined_call_operand.vmem [shape: bf16[2,36,256], index: 2, kind: input, shape index: {}]
  %s3 = inlined_call_operand.hbm [shape: f32[2,16,256], index: 3, kind: output, shape index: {}]
  %s4 = sld [smem:[#allocation0]]
  $region45: #{tpu_custom_call.1} parent=0
    _
  %s6 = ssub.s32 1, %s4
  %s7 = scalar_select 0, %s6, %s4
  $region1: #{tpu_custom_call.1} parent=0
    #allocation2 [shape = 'u8[32768]{0}', space=vmem, size = 0x8000, scoped, tag = 'output window, operand 0']
    #allocation3 [shape = 's32[2]{0}', space=sflag, size = 0x8, scoped, tag = 'scoped memory for tpu_custom_call.1']
    %8 = vsyncpa [#allocation3], 0
    %s9 = scalar_lea.sflag [#allocation3], 1
    %10 = vsyncpa %s9, 0
    loop: start=0, step=1, limit=4
    $region2: #{tpu_custom_call.1} parent=1 // loop_pre_header
      _
    $region3: #{tpu_custom_call.1} parent=1 // loop_header
      %s12 = sphi 0, %s16
      %p13 = scmp.ge.s32.totalorder %s12, 4
      %s20 = sphi 0, %s20
      %s22 = sphi 0, %s20
      %s23 = sphi 0, %s22
      %s37 = sphi 0, %s23
      %s41 = sphi 0, %s41
      %s43 = sphi 0, %s41
      %s44 = sphi 0, %s43
      %s58 = sphi 0, %s44
      %s64 = sphi 0, %s66
      %s67 = sphi 0, %s64
      %s68 = sphi 0, %s67
      %s84 = sphi 0, %s68
      %s90 = sphi 0, %s92
      %s93 = sphi 0, %s90
      %s94 = sphi 0, %s93
      %s110 = sphi 0, %s94
    $region4: #{tpu_custom_call.1} parent=1 // loop_header_branch
      %15 = sbr.rel (%p13) target = $region8
    $region5: #{tpu_custom_call.1} parent=1 // loop_body
      %s17 = ssub.s32 %s12, 1
      %s18 = ssub.s32 %s12, 2
      %s19 = sadd.s32 %s12, 1
      %s21 = sadd.s32 %s20, 1
      %p24 = scmp.eq.s32.totalorder %s12, 1
      %p25 = scmp.ne.s32.totalorder %s20, %s22
      %p26 = scmp.eq.s32.totalorder %s12, 0
      %p27 = por %p25, %p26
      %p28 = scmp.ne.s32.totalorder %s20, %s22
      %p29 = scmp.eq.s32.totalorder %s17, 1
      %p30 = por %p28, %p29
      %p31 = scmp.ne.s32.totalorder %s22, %s23
      %p32 = scmp.eq.s32.totalorder %s17, 0
      %p33 = por %p31, %p32
      %p34 = scmp.ne.s32.totalorder %s22, %s23
      %p35 = scmp.eq.s32.totalorder %s18, 1
      %p36 = por %p34, %p35
      %p38 = scmp.ne.s32.totalorder %s23, %s37
      %p39 = scmp.eq.s32.totalorder %s18, 0
      %p40 = por %p38, %p39
      %s42 = sadd.s32 %s41, 1
      %p45 = scmp.eq.s32.totalorder %s12, 1
      %p46 = scmp.ne.s32.totalorder %s41, %s43
      %p47 = scmp.eq.s32.totalorder %s12, 0
      %p48 = por %p46, %p47
      %p49 = scmp.ne.s32.totalorder %s41, %s43
      %p50 = scmp.eq.s32.totalorder %s17, 1
      %p51 = por %p49, %p50
      %p52 = scmp.ne.s32.totalorder %s43, %s44
      %p53 = scmp.eq.s32.totalorder %s17, 0
      %p54 = por %p52, %p53
      %p55 = scmp.ne.s32.totalorder %s43, %s44
      %p56 = scmp.eq.s32.totalorder %s18, 1
      %p57 = por %p55, %p56
      %p59 = scmp.ne.s32.totalorder %s44, %s58
      %p60 = scmp.eq.s32.totalorder %s18, 0
      %p61 = por %p59, %p60
      %s62 = ssub.s32 %s12, %s19
      %p63 = scmp.eq.s32.totalorder %s62, 0
      %s65 = sadd.s32 %s64, 1
      %s66 = scalar_select %p63, %s64, %s65
      %p69 = pneg %p63
      %p70 = scmp.eq.s32.totalorder %s12, 1
      %p71 = por %p69, %p70
      %p72 = scmp.ne.s32.totalorder %s64, %s67
      %p73 = scmp.eq.s32.totalorder %s12, 0
      %p74 = por %p72, %p73
      %p75 = scmp.ne.s32.totalorder %s64, %s67
      %p76 = scmp.eq.s32.totalorder %s17, 1
      %p77 = por %p75, %p76
      %p78 = scmp.ne.s32.totalorder %s67, %s68
      %p79 = scmp.eq.s32.totalorder %s17, 0
      %p80 = por %p78, %p79
      %p81 = scmp.ne.s32.totalorder %s67, %s68
      %p82 = scmp.eq.s32.totalorder %s18, 1
      %p83 = por %p81, %p82
      %p85 = scmp.ne.s32.totalorder %s68, %s84
      %p86 = scmp.eq.s32.totalorder %s18, 0
      %p87 = por %p85, %p86
      %s88 = ssub.s32 %s12, %s19
      %p89 = scmp.eq.s32.totalorder %s88, 0
      %s91 = sadd.s32 %s90, 1
      %s92 = scalar_select %p89, %s90, %s91
      %p95 = pneg %p89
      %p96 = scmp.eq.s32.totalorder %s12, 1
      %p97 = por %p95, %p96
      %p98 = scmp.ne.s32.totalorder %s90, %s93
      %p99 = scmp.eq.s32.totalorder %s12, 0
      %p100 = por %p98, %p99
      %p101 = scmp.ne.s32.totalorder %s90, %s93
      %p102 = scmp.eq.s32.totalorder %s17, 1
      %p103 = por %p101, %p102
      %p104 = scmp.ne.s32.totalorder %s93, %s94
      %p105 = scmp.eq.s32.totalorder %s17, 0
      %p106 = por %p104, %p105
      %p107 = scmp.ne.s32.totalorder %s93, %s94
      %p108 = scmp.eq.s32.totalorder %s18, 1
      %p109 = por %p107, %p108
      %p111 = scmp.ne.s32.totalorder %s94, %s110
      %p112 = scmp.eq.s32.totalorder %s18, 0
      %p113 = por %p111, %p112
      %p114 = scmp.le.s32.totalorder 1, %s12
      %p115 = scmp.lt.s32.totalorder %s12, 3
      %p116 = pnand %p114, %p115
      %p117 = pneg %p116
      // Predicated region
      $region9: #{tpu_custom_call.1} parent=5 // pred_check
        _
      $region10: #{tpu_custom_call.1} parent=5 // pred_check_branch
        %119 = sbr.rel (%p116) target = $region12
      $region11: #{tpu_custom_call.1} parent=5 // pred_region
        %s120 = ssub.s32 %s12, 1
        // Predicated region
        $region13: #{tpu_custom_call.1} parent=11 // pred_check
          %p121 = pneg %p33
        $region14: #{tpu_custom_call.1} parent=11 // pred_check_branch
          %123 = sbr.rel (%p121) target = $region16
        $region15: #{tpu_custom_call.1} parent=11 // pred_region
          _
        $region16: #{tpu_custom_call.1} parent=11 // pred_fallthru
          _
        // Predicated region
        $region17: #{tpu_custom_call.1} parent=11 // pred_check
          %p124 = pneg %p54
        $region18: #{tpu_custom_call.1} parent=11 // pred_check_branch
          %126 = sbr.rel (%p124) target = $region20
        $region19: #{tpu_custom_call.1} parent=11 // pred_region
          _
        $region20: #{tpu_custom_call.1} parent=11 // pred_fallthru
          _
      $region12: #{tpu_custom_call.1} parent=5 // pred_fallthru
        _
      %p127 = scmp.lt.s32.totalorder %s12, 2
      // Predicated region
      $region21: #{tpu_custom_call.1} parent=5 // pred_check
        %p128 = pneg %p127
      $region22: #{tpu_custom_call.1} parent=5 // pred_check_branch
        %130 = sbr.rel (%p128) target = $region24
      $region23: #{tpu_custom_call.1} parent=5 // pred_region
        // Predicated region
        $region25: #{tpu_custom_call.1} parent=23 // pred_check
          %p131 = pneg %p74
        $region26: #{tpu_custom_call.1} parent=23 // pred_check_branch
          %133 = sbr.rel (%p131) target = $region28
        $region27: #{tpu_custom_call.1} parent=23 // pred_region
          %p134 = scmp.lt.s32.totalorder %s12, 1
          %s135 = scalar_select %p134, %s12, 1
          %s136 = smul.addr %s135, 10
          %s137 = smul.addr %s136, 4
          %s138 = scalar_lea.vmem %s2, %s137
        $region28: #{tpu_custom_call.1} parent=23 // pred_fallthru
          _
      $region24: #{tpu_custom_call.1} parent=5 // pred_fallthru
        _
      %p139 = scmp.le.s32.totalorder 1, %s12
      %p140 = scmp.lt.s32.totalorder %s12, 3
      %p141 = pnand %p139, %p140
      %p142 = pneg %p141
      // Predicated region
      $region29: #{tpu_custom_call.1} parent=5 // pred_check
        _
      $region30: #{tpu_custom_call.1} parent=5 // pred_check_branch
        %144 = sbr.rel (%p141) target = $region32
      $region31: #{tpu_custom_call.1} parent=5 // pred_region
        %s145 = ssub.s32 %s12, 1
        %p146 = pneg %p33
        %p147 = pneg %p30
        %p148 = pneg %p54
        %p149 = pneg %p51
        %p150 = scmp.lt.s32.totalorder %s17, 1
        %s151 = scalar_select %p150, %s17, 1
        %s152 = smul.addr %s151, 10
        %s153 = smul.addr %s152, 4
        %s154 = scalar_lea.vmem %s2, %s153
        %p155 = pneg %p80
        %p156 = pneg %p77
        %p157 = pneg %p106
        %p158 = pneg %p103
        %s159 = sand.u32 %s93, 1
        %s160 = scalar_lea.sflag [#allocation3], %s159
        %s161 = sand.u32 %s93, 1
        %s162 = smul.addr %s161, 32
        %s163 = scalar_lea.vmem [#allocation2], %s162
        %p164 = scmp.lt.s32.totalorder %s17, 1
        %s165 = scalar_select %p164, %s17, 1
        %s166 = smul.addr %s165, 10
        %s167 = smul.addr %s166, 4
        %s168 = scalar_lea.vmem %s2, %s167
        %v170 = vld [vmem:[%s0] sm:$0xf]
        %v171 = vld [vmem:[%s0 + $0x4] sm:$0xf]
        %v172 = vld [vmem:[%s168] sm:$0xff]
        %v173 = vld [vmem:[%s168 + $0x8] sm:$0xff]
        %v174 = vld [vmem:[%s168 + $0x10] sm:$0xff]
        %v175 = vld [vmem:[%s168 + $0x18] sm:$0xff]
        %v176 = vld [vmem:[%s168 + $0x20] sm:$0x33]
        %v177 = vld [vmem:[%s1] sm:$0xff]
        %v178 = vld [vmem:[%s1 + $0x8] sm:$0xff]
        %180 = vset.pattern.permute.xlu0 0
        %181 = vperm.xlu0 %180, %v177
        %v182 = vpop.permute.xlu0 %181
        %185 = vset.pattern.permute.xlu0 0
        %186 = vperm.xlu0 %185, %v178
        %v187 = vpop.permute.xlu0 %186
        %v191 = vunpack.c.l.b16 %v170
        %v192 = vunpack.c.l.b16 %v171
        %v193 = vpack.c.b16 %v192, %v191
        %v199 = vunpack.c.l.b16 %v172
        %v200 = vunpack.c.h.b16 %v172
        %v201 = vunpack.c.l.b16 %v173
        %v202 = vunpack.c.h.b16 %v173
        %v203 = vunpack.c.l.b16 %v174
        %v204 = vunpack.c.h.b16 %v174
        %v205 = vunpack.c.l.b16 %v175
        %v206 = vunpack.c.h.b16 %v175
        %v207 = vunpack.c.l.b16 %v176
        %v208 = vunpack.c.h.b16 %v176
        %v209 = vpack.c.b16 %v201, %v199
        %v210 = vpack.c.b16 %v202, %v200
        %v211 = vpack.c.b16 %v205, %v203
        %v212 = vpack.c.b16 %v206, %v204
        %v213 = vpack.c.b16 %v207, %v207
        %v214 = vpack.c.b16 %v208, %v208
        %vm219 = vcmask 293888
        %v221 = vsel %vm219, %v193, 0
        %vm223 = vcmask 1041408
        %v225 = vsel %vm223, %v213, 0
        %v228 = vsel %vm223, %v214, 0
        %230 = vmatprep.subr.bf16.mxu0 %v210
        %231 = vmatpush1.bf16.msra.mxu0 %v209
        %232 = vmatprep.subr.bf16.mxu0 %v212
        %233 = vmatpush1.bf16.msra.mxu0 %v211
        %234 = vmatprep.subr.bf16.mxu0 %v228
        %235 = vmatpush1.bf16.msra.mxu0 %v225
        %236 = vmatprep.subr.bf16.mxu0 0
        %237 = vmatpush1.bf16.msra.mxu0 0
        %238 = vmatprep.subr.bf16.mxu0 0
        %239 = vmatpush1.bf16.msra.mxu0 0
        %240 = vmatprep.subr.bf16.mxu0 0
        %241 = vmatpush1.bf16.msra.mxu0 0
        %242 = vmatprep.subr.bf16.mxu0 0
        %243 = vmatpush1.bf16.msra.mxu0 0
        %244 = vmatprep.subr.bf16.mxu0 0
        %245 = vmatpush1.bf16.msra.mxu0 0
        %246 = vmatprep.subr.bf16.mxu0 0
        %247 = vmatpush1.bf16.msra.mxu0 0
        %248 = vmatprep.subr.bf16.mxu0 0
        %249 = vmatpush1.bf16.msra.mxu0 0
        %250 = vmatprep.subr.bf16.mxu0 0
        %251 = vmatpush1.bf16.msra.mxu0 0
        %252 = vmatprep.subr.bf16.mxu0 0
        %253 = vmatpush1.bf16.msra.mxu0 0
        %254 = vmatprep.subr.bf16.mxu0 0
        %255 = vmatpush1.bf16.msra.mxu0 0
        %256 = vmatprep.subr.bf16.mxu0 0
        %257 = vmatpush1.bf16.msra.mxu0 0
        %258 = vmatprep.subr.bf16.mxu0 0
        %259 = vmatpush1.bf16.msra.mxu0 0
        %260 = vmatprep.subr.bf16.mxu0 0
        %261 = vmatpush1.bf16.msra.mxu0 0
        %262 = vmatprep.mubr.bf16.mxu0 0
        %263 = vmatmul.mubr.bf16.gmra.mrb[0].mxu0 %v221
        %v264 = vpop.f32.mrb[0].mxu0
        %v265 = vadd.f32 %v182, %v264
        %v266 = vpop.f32.mrb[0].mxu0
        %v267 = vadd.f32 %v182, %v266
        %v268 = vpop.f32.mrb[0].mxu0
        %v269 = vadd.f32 %v187, %v268
        %v270 = vpop.f32.mrb[0].mxu0
        %v271 = vadd.f32 %v187, %v270
        %272 = vdwg.mxu0
        %273 = vst [vmem:[%s163] sm:$0xff] %v265
        %274 = vst [vmem:[%s163 + $0x8] sm:$0xff] %v267
        %275 = vst [vmem:[%s163 + $0x10] sm:$0xff] %v269
        %276 = vst [vmem:[%s163 + $0x18] sm:$0xff] %v271
        %s277 = sand.u32 %s93, 1
        %s278 = scalar_lea.sflag [#allocation3], %s277
        %s279 = sand.u32 %s93, 1
        %s280 = smul.addr %s279, 32
        %s281 = scalar_lea.vmem [#allocation2], %s280
        // Predicated region
        $region33: #{tpu_custom_call.1} parent=31 // pred_check
          %p282 = pneg %p103
        $region34: #{tpu_custom_call.1} parent=31 // pred_check_branch
          %284 = sbr.rel (%p282) target = $region36
        $region35: #{tpu_custom_call.1} parent=31 // pred_region
          %s286 = ssub.s32 512, 512
          %287 = vsyncadd %s278, %s286
          %s288 = smul.addr %s17, 4
          %s289 = smul.addr %s288, 128
          %s290 = scalar_lea.hbm %s3, %s289
          %s291 = sshll.u32 %s281, 4
          %s292 = int_to_ptr.vmem [resolvable:$true] %s291
          %297 = dma.vmem_to_hbm [thread:$0]  %s292, 512, %s290, %s278, 256, 256, 16
        $region36: #{tpu_custom_call.1} parent=31 // pred_fallthru
          _
      $region32: #{tpu_custom_call.1} parent=5 // pred_fallthru
        _
      %p298 = scmp.le.s32.totalorder 2, %s12
      // Predicated region
      $region37: #{tpu_custom_call.1} parent=5 // pred_check
        %p299 = pneg %p298
      $region38: #{tpu_custom_call.1} parent=5 // pred_check_branch
        %301 = sbr.rel (%p299) target = $region40
      $region39: #{tpu_custom_call.1} parent=5 // pred_region
        %s302 = ssub.s32 %s12, 2
        // Predicated region
        $region41: #{tpu_custom_call.1} parent=39 // pred_check
          %p303 = pneg %p109
        $region42: #{tpu_custom_call.1} parent=39 // pred_check_branch
          %305 = sbr.rel (%p303) target = $region44
        $region43: #{tpu_custom_call.1} parent=39 // pred_region
          %s306 = sand.u32 %s94, 1
          %s307 = scalar_lea.sflag [#allocation3], %s306
          %s308 = sand.u32 %s94, 1
          %s309 = smul.addr %s308, 32
          %s310 = scalar_lea.vmem [#allocation2], %s309
          %311 = dma.done %s307, 512
        $region44: #{tpu_custom_call.1} parent=39 // pred_fallthru
          _
      $region40: #{tpu_custom_call.1} parent=5 // pred_fallthru
        _
    $region6: #{tpu_custom_call.1} parent=1 // loop_footer
      %s16 = sadd.s32 1, %s12
    $region7: #{tpu_custom_call.1} parent=1 // loop_footer_branch
      %11 = sbr.rel target = $region3
    $region8: #{tpu_custom_call.1} parent=1 // loop_exit
      _
    %312 = vsyncpa [#allocation3], 1
    %s313 = scalar_lea.sflag [#allocation3], 1
    %314 = vsyncpa %s313, 1

</llo_original>
